<compile_context>
chip_gen: v7x
topology: tpu7x:2x2x1
jax: 0.10.0
libtpu: 0.0.40
codegen_flags: <defaults>
</compile_context>

<pallas_src>
import functools

import jax
import jax.numpy as jnp
from jax import lax
from jax.experimental import pallas as pl
from jax.experimental.pallas import tpu as pltpu

_LANE = 128
_SUB = 16          # sublane alignment that also covers bf16 packing


def _round_up(x, m):
    return ((x + m - 1) // m) * m


# ---------------------------------------------------------------------------
# Kernel bodies
# ---------------------------------------------------------------------------
def _resident_kernel(x_ref, v_ref, cs_ref, o_ref, *, scale_factor, eps, fast_math):
    """Weight matrix v fully resident in VMEM; grid iterates batch tiles only."""
    x = x_ref[...]                                     # [TM, Kp] (bf16 or f32)
    xf = x.astype(jnp.float32)
    xsq = jnp.sum(xf * xf, axis=1, keepdims=True)      # [TM, 1] fused ||x||^2
    raw = lax.dot_general(                             # [TM, Np] un-normalized x @ v.T
        x, v_ref[...],
        dimension_numbers=(((1,), (1,)), ((), ())),
        preferred_element_type=jnp.float32)
    if fast_math:
        row_inv = pl.reciprocal(jnp.sqrt(xsq) + eps, approx=True)   # EUP slot
    else:
        row_inv = 1.0 / (jnp.sqrt(xsq) + eps)
    cs = cs_ref[...]                                   # [1, Np] = g / ||v|| (precomputed f32)
    o_ref[...] = (scale_factor * raw * row_inv * cs).astype(o_ref.dtype)


def _tiled_kernel(x_ref, v_ref, cs_ref, o_ref, acc_ref, xsq_ref,
                  *, scale_factor, eps, fast_math):
    """Tiled fallback: (m, n, k) grid, K innermost, f32 VMEM accumulator."""
    k = pl.program_id(2)
    nk = pl.num_programs(2)

    @pl.when(k == 0)
    def _init():
        acc_ref[...] = jnp.zeros_like(acc_ref)
        xsq_ref[...] = jnp.zeros_like(xsq_ref)

    x = x_ref[...]                                     # [TM, TK] already mxu dtype
    v = v_ref[...]                                     # [TN, TK]
    xf = x.astype(jnp.float32)
    xsq_ref[...] += jnp.sum(xf * xf, axis=1, keepdims=True)          # [TM, 1]
    acc_ref[...] += lax.dot_general(                                  # [TM, TN]
        x, v,
        dimension_numbers=(((1,), (1,)), ((), ())),
        preferred_element_type=jnp.float32)

    @pl.when(k == nk - 1)
    def _finalize():
        xsq = xsq_ref[...]
        if fast_math:
            row_inv = pl.reciprocal(jnp.sqrt(xsq) + eps, approx=True)
        else:
            row_inv = 1.0 / (jnp.sqrt(xsq) + eps)
        cs = cs_ref[...]                               # [1, TN] = g / ||v||
        o_ref[...] = (scale_factor * (acc_ref[...] * row_inv * cs)).astype(o_ref.dtype)


# ---------------------------------------------------------------------------
# Wrapper
# ---------------------------------------------------------------------------
def dist_linear(x, v, g, *, tm=None, tn=None, tk=None,
                use_bf16_matmul=True, fast_math=None, out_dtype=None,
                max_resident_bytes=None):
    """Pallas implementation of distLinear.forward.

    x: [B, indim], v: [outdim, indim] (weight_norm "v"), g: [outdim, 1] or [outdim].
    Returns scores [B, outdim].  out_dtype=jnp.bfloat16 halves output HBM traffic
    for downstream bf16 consumers.
    """
    B, indim = x.shape
    outdim, indim_v = v.shape
    assert indim_v == indim, "x / v feature dims must match"
    scale_factor = 2.0 if outdim <= 200 else 10.0
    fast_math = use_bf16_matmul if fast_math is None else fast_math
    out_dtype = x.dtype if out_dtype is None else out_dtype
    mxu_dtype = jnp.bfloat16 if use_bf16_matmul else x.dtype

    # One-time hoisted weight norm (f32, before padding): col_scale = g / ||v||.
    # Padded class columns get col_scale = 0 -> finite zero scores (no NaN).
    g_vec = jnp.reshape(g, (outdim,)).astype(jnp.float32)
    v_norm = jnp.sqrt(jnp.sum(jnp.square(v.astype(jnp.float32)), axis=1))
    col_scale = (g_vec / v_norm).reshape(1, outdim)

    # Generation-aware VMEM budgets (v7x-like parts have 64 MiB / TC, 2 TCs).
    try:
        vmem_cap = int(getattr(pltpu.get_tpu_info(), "vmem_capacity_bytes",
                               128 * 1024 * 1024))
    except Exception:
        vmem_cap = 128 * 1024 * 1024
    small_vmem = vmem_cap <= 64 * 1024 * 1024
    vmem_limit = (40 if small_vmem else 96) * 1024 * 1024
    if max_resident_bytes is None:
        max_resident_bytes = (28 if small_vmem else 80) * 1024 * 1024

    Kp = _round_up(indim, _LANE)
    Np = _round_up(outdim, _LANE)
    item = jnp.dtype(mxu_dtype).itemsize
    out_item = jnp.dtype(out_dtype).itemsize

    # ---------------- resident-weight fast path ----------------
    tm_r = min(tm if tm is not None else 256, _round_up(B, _SUB))
    tm_r = _round_up(tm_r, _SUB)
    if small_vmem and _round_up(B, tm_r) // tm_r == 1 and B > _SUB:
        # keep >= 2 batch blocks so the 2 TensorCores both get work
        tm_r = _round_up(pl.cdiv(B, 2), _SUB)
    Bp_r = _round_up(B, tm_r)
    resident_bytes = (2 * Np * Kp * item            # v (conservatively 2 buffers)
                      + 2 * tm_r * Kp * item        # x tile, double buffered
                      + 2 * tm_r * Np * out_item    # out tile, double buffered
                      + 2 * Np * 4)                 # col_scale
    use_resident = resident_bytes <= max_resident_bytes

    if use_resident:
        Bp = Bp_r
        xp = jnp.pad(x, ((0, Bp - B), (0, Kp - indim))) if (Bp, Kp) != (B, indim) else x
        vp = jnp.pad(v, ((0, Np - outdim), (0, Kp - indim))) if (Np, Kp) != (outdim, indim) else v
        csp = jnp.pad(col_scale, ((0, 0), (0, Np - outdim))) if Np != outdim else col_scale
        xp = xp.astype(mxu_dtype)
        vp = vp.astype(mxu_dtype)

        kernel = functools.partial(_resident_kernel, scale_factor=scale_factor,
                                   eps=1e-5, fast_math=fast_math)
        out = pl.pallas_call(
            kernel,
            out_shape=jax.ShapeDtypeStruct((Bp, Np), out_dtype),
            grid_spec=pltpu.PrefetchScalarGridSpec(
                num_scalar_prefetch=0,
                grid=(Bp // tm_r,),
                in_specs=[
                    pl.BlockSpec((tm_r, Kp), lambda m: (m, 0)),   # streamed x tile
                    pl.BlockSpec((Np, Kp), lambda m: (0, 0)),     # resident v (fetched once)
                    pl.BlockSpec((1, Np), lambda m: (0, 0)),      # g/||v|| (lane-major)
                ],
                out_specs=pl.BlockSpec((tm_r, Np), lambda m: (m, 0)),
            ),
            compiler_params=pltpu.CompilerParams(
                dimension_semantics=("parallel",),
                vmem_limit_bytes=vmem_limit,
            ),
        )(xp, vp, csp)
        return out[:B, :outdim]

    # ---------------- tiled fallback (large heads) ----------------
    tm_t = _round_up(min(tm if tm is not None else 512, _round_up(B, _SUB)), _SUB)
    tn_t = _round_up(min(tn if tn is not None else 512, Np), _LANE)
    tk_t = _round_up(min(tk if tk is not None else 1024, Kp), _LANE)

    Bp = _round_up(B, tm_t)
    Npp = _round_up(outdim, tn_t)
    Kpp = _round_up(indim, tk_t)
    xp = jnp.pad(x, ((0, Bp - B), (0, Kpp - indim))) if (Bp, Kpp) != (B, indim) else x
    vp = jnp.pad(v, ((0, Npp - outdim), (0, Kpp - indim))) if (Npp, Kpp) != (outdim, indim) else v
    csp = jnp.pad(col_scale, ((0, 0), (0, Npp - outdim))) if Npp != outdim else col_scale
    xp = xp.astype(mxu_dtype)
    vp = vp.astype(mxu_dtype)

    grid = (Bp // tm_t, Npp // tn_t, Kpp // tk_t)
    kernel = functools.partial(_tiled_kernel, scale_factor=scale_factor,
                               eps=1e-5, fast_math=fast_math)
    out = pl.pallas_call(
        kernel,
        out_shape=jax.ShapeDtypeStruct((Bp, Npp), out_dtype),
        grid_spec=pltpu.PrefetchScalarGridSpec(
            num_scalar_prefetch=0,
            grid=grid,
            in_specs=[
                pl.BlockSpec((tm_t, tk_t), lambda m, n, k: (m, k)),   # x tile
                pl.BlockSpec((tn_t, tk_t), lambda m, n, k: (n, k)),   # v tile
                pl.BlockSpec((1, tn_t), lambda m, n, k: (0, n)),      # g/||v||
            ],
            out_specs=pl.BlockSpec((tm_t, tn_t), lambda m, n, k: (m, n)),
            scratch_shapes=[
                pltpu.VMEM((tm_t, tn_t), jnp.float32),   # f32 accumulator
                pltpu.VMEM((tm_t, 1), jnp.float32),      # sum_k x^2 per batch row
            ],
        ),
        compiler_params=pltpu.CompilerParams(
            dimension_semantics=("parallel", "parallel", "arbitrary"),
            vmem_limit_bytes=vmem_limit,
        ),
    )(xp, vp, csp)
    return out[:B, :outdim]


# ---------------------------------------------------------------------------
# Reference + tests
# ---------------------------------------------------------------------------
def dist_linear_ref(x, v, g):
    outdim = v.shape[0]
    scale_factor = 2.0 if outdim <= 200 else 10.0
    x_n = x / (jnp.linalg.norm(x, axis=1, keepdims=True) + 1e-5)
    w = jnp.reshape(g, (outdim, 1)) * v / jnp.linalg.norm(v, axis=1, keepdims=True)
    return scale_factor * jnp.dot(x_n, w.T, precision=jax.lax.Precision.HIGHEST)


def _make_inputs(key, B, indim, outdim):
    kx, kv = jax.random.split(key)
    x = jax.random.normal(kx, (B, indim), dtype=jnp.float32)
    # nn.Linear init + weight_norm g init (g = ||v|| per row, so W == v at init).
    bound = 1.0 / (indim ** 0.5)
    v = jax.random.uniform(kv, (outdim, indim), dtype=jnp.float32,
                           minval=-bound, maxval=bound)
    g = jnp.linalg.norm(v, axis=1, keepdims=True)    # [outdim, 1]
    return x, v, g


if __name__ == "__main__":
    # Test 1: tiny shape, resident path, f32 MXU + exact math, tight tolerance.
    x, v, g = _make_inputs(jax.random.PRNGKey(0), 8, 32, 16)
    out = dist_linear(x, v, g, use_bf16_matmul=False)
    jax.block_until_ready(out)
    ref = dist_linear_ref(x, v, g)
    assert out.shape == (8, 16)
    assert jnp.allclose(out, ref, atol=2e-4, rtol=2e-4), (
        f"f32 resident path max err {jnp.max(jnp.abs(out - ref))}")
    assert jnp.all(jnp.isfinite(out))

    # Test 2: resident path, bf16 operands, padding on every axis, scale=10.
    x, v, g = _make_inputs(jax.random.PRNGKey(1), 24, 320, 272)
    out = dist_linear(x, v, g, use_bf16_matmul=True)
    jax.block_until_ready(out)
    ref = dist_linear_ref(x, v, g)
    assert out.shape == (24, 272)
    assert jnp.allclose(out, ref, atol=5e-2, rtol=5e-2), (
        f"bf16 resident path max err {jnp.max(jnp.abs(out - ref))}")
    assert jnp.all(jnp.isfinite(out))

    # Test 3: force the tiled fallback (multi-tile grid, K-accumulator), bf16.
    out = dist_linear(x, v, g, tm=16, tn=128, tk=128,
                      use_bf16_matmul=True, max_resident_bytes=0)
    jax.block_until_ready(out)
    assert out.shape == (24, 272)
    assert jnp.allclose(out, ref, atol=5e-2, rtol=5e-2), (
        f"bf16 tiled path max err {jnp.max(jnp.abs(out - ref))}")
    assert jnp.all(jnp.isfinite(out))

    print("KERNEL_OK")
</pallas_src>

<mosaic_0001>
module attributes {stable_mosaic.version = 11 : i64} {
  func.func @_resident_kernel(%arg0: i32, %arg1: memref<16x128xf32, #tpu.memory_space<vmem>>, %arg2: memref<128x128xf32, #tpu.memory_space<vmem>>, %arg3: memref<1x128xf32, #tpu.memory_space<vmem>>, %arg4: memref<16x128xf32, #tpu.memory_space<vmem>>) attributes {dimension_semantics = [#tpu.dimension_semantics<parallel>], iteration_bounds = array<i64: 1>, scalar_prefetch = 0 : i64, scratch_operands = 0 : i64, tpu.core_type = #tpu.core_type<tc>, window_params = [{transform_indices = @transform_0, window_bounds = array<i64: 16, 128>}, {pipeline_mode = #tpu.pipeline_mode<synchronous>, transform_indices = @transform_1, window_bounds = array<i64: 128, 128>}, {pipeline_mode = #tpu.pipeline_mode<synchronous>, transform_indices = @transform_2, window_bounds = array<i64: 1, 128>}, {transform_indices = @transform_3, window_bounds = array<i64: 16, 128>}]} {
    %c0 = arith.constant 0 : index
    %c0_0 = arith.constant 0 : index
    %0 = vector.load %arg1[%c0, %c0_0] : memref<16x128xf32, #tpu.memory_space<vmem>>, vector<16x128xf32>
    %1 = arith.mulf %0, %0 : vector<16x128xf32>
    %cst = arith.constant dense<0.000000e+00> : vector<16xf32>
    %2 = vector.multi_reduction <add>, %1, %cst [1] : vector<16x128xf32> to vector<16xf32>
    %3 = vector.shape_cast %2 : vector<16xf32> to vector<16x1xf32>
    %c0_1 = arith.constant 0 : index
    %c0_2 = arith.constant 0 : index
    %4 = vector.load %arg2[%c0_1, %c0_2] : memref<128x128xf32, #tpu.memory_space<vmem>>, vector<128x128xf32>
    %cst_3 = arith.constant dense<0.000000e+00> : vector<16x128xf32>
    %5 = tpu.matmul %0, %4, %cst_3 {dimension_numbers = #tpu.dot_dimension_numbers<[1], [1], [0], [0], [0, 0, 1, 0], [], []>} : vector<16x128xf32>, vector<128x128xf32>, vector<16x128xf32> -> vector<16x128xf32>
    %6 = math.sqrt %3 : vector<16x1xf32>
    %cst_4 = arith.constant 9.99999974E-6 : f32
    %7 = vector.broadcast %cst_4 : f32 to vector<16x1xf32>
    %8 = arith.addf %6, %7 : vector<16x1xf32>
    %cst_5 = arith.constant 1.000000e+00 : f32
    %9 = vector.broadcast %cst_5 : f32 to vector<16x1xf32>
    %10 = arith.divf %9, %8 : vector<16x1xf32>
    %c0_6 = arith.constant 0 : index
    %c0_7 = arith.constant 0 : index
    %11 = vector.load %arg3[%c0_6, %c0_7] : memref<1x128xf32, #tpu.memory_space<vmem>>, vector<1x128xf32>
    %cst_8 = arith.constant 2.000000e+00 : f32
    %12 = vector.broadcast %cst_8 : f32 to vector<16x128xf32>
    %13 = arith.mulf %12, %5 : vector<16x128xf32>
    %14 = vector.broadcast %10 : vector<16x1xf32> to vector<16x128xf32>
    %15 = arith.mulf %13, %14 : vector<16x128xf32>
    %16 = vector.broadcast %11 : vector<1x128xf32> to vector<16x128xf32>
    %17 = arith.mulf %15, %16 : vector<16x128xf32>
    %c0_9 = arith.constant 0 : index
    %c0_10 = arith.constant 0 : index
    %18 = vector.load %arg4[%c0_9, %c0_10] : memref<16x128xf32, #tpu.memory_space<vmem>>, vector<16x128xf32>
    tpu.vector_store %arg4[%c0_9, %c0_10], %17 {strides = array<i32>} : memref<16x128xf32, #tpu.memory_space<vmem>>, vector<16x128xf32>,
    return
  }
  func.func @transform_0(%arg0: i32) -> (i32, i32) {
    %c0_i32 = arith.constant 0 : i32
    %c0_i32_0 = arith.constant 0 : i32
    return %arg0, %c0_i32 : i32, i32
  }
  func.func @transform_1(%arg0: i32) -> (i32, i32) {
    %c0_i32 = arith.constant 0 : i32
    %c0_i32_0 = arith.constant 0 : i32
    %c0_i32_1 = arith.constant 0 : i32
    return %c0_i32, %c0_i32_0 : i32, i32
  }
  func.func @transform_2(%arg0: i32) -> (i32, i32) {
    %c0_i32 = arith.constant 0 : i32
    %c0_i32_0 = arith.constant 0 : i32
    %c0_i32_1 = arith.constant 0 : i32
    return %c0_i32, %c0_i32_0 : i32, i32
  }
  func.func @transform_3(%arg0: i32) -> (i32, i32) {
    %c0_i32 = arith.constant 0 : i32
    %c0_i32_0 = arith.constant 0 : i32
    return %arg0, %c0_i32 : i32, i32
  }
}

</mosaic_0001>

<llo_original>
// kernel: tpu_custom_call.1
$region0: #{tpu_custom_call.1}
  #allocation0 [shape = 'u32[]', space=smem, size = 0x4, offset = 0x4, fixed_abs, tag = 'smem constant byte address 0x4 - core index']
  #allocation1 [shape = 'u32[144,128]{1,0:T(1,128)}', space=vmem, size = 0x12000, scoped, tag = 'internal scratch']
  %s0 = inlined_call_operand.hbm [shape: f32[16,128], index: 0, kind: input, shape index: {}]
  %s1 = inlined_call_operand.hbm [shape: f32[128,128], index: 1, kind: input, shape index: {}]
  %s2 = inlined_call_operand.hbm [shape: f32[1,128], index: 2, kind: input, shape index: {}]
  %s3 = inlined_call_operand.hbm [shape: f32[16,128], index: 3, kind: output, shape index: {}]
  %s4 = sld [smem:[#allocation0]]
  $region34: #{tpu_custom_call.1} parent=0
    _
  %s6 = ssub.s32 1, %s4
  %s7 = scalar_select 0, %s6, %s4
  $region1: #{tpu_custom_call.1} parent=0
    #allocation2 [shape = 'u8[8192]{0}', space=vmem, size = 0x2000, scoped, tag = 'input window, operand 0, single buffered']
    #allocation3 [shape = 's32[1]{0}', space=sflag, size = 0x4, scoped, tag = 'scoped memory for tpu_custom_call.1']
    #allocation4 [shape = 's32[1]{0}', space=sflag, size = 0x4, scoped, tag = 'scoped memory for tpu_custom_call.1']
    #allocation5 [shape = 'u8[65536]{0}', space=vmem, size = 0x10000, scoped, tag = 'input window, operand 1, single buffered']
    #allocation6 [shape = 's32[1]{0}', space=sflag, size = 0x4, scoped, tag = 'scoped memory for tpu_custom_call.1']
    #allocation7 [shape = 'u8[512]{0}', space=vmem, size = 0x400, scoped, tag = 'input window, operand 2, single buffered']
    #allocation8 [shape = 'u8[8192]{0}', space=vmem, size = 0x2000, scoped, tag = 'output window, operand 0, single buffered']
    %8 = vsyncpa [#allocation3], 0
    %9 = vsyncpa [#allocation6], 0
    %10 = vsyncpa [#allocation4], 0
    // Predicated region
    $region2: #{tpu_custom_call.1} parent=1 // pred_check
      _
    $region3: #{tpu_custom_call.1} parent=1 // pred_check_branch
      %12 = sbr.rel (0) target = $region5
    $region4: #{tpu_custom_call.1} parent=1 // pred_region
      %s14 = ssub.s32 256, 256
      %15 = vsyncadd [#allocation3], %s14
      %s16 = sshll.u32 [#allocation2], 4
      %s17 = int_to_ptr.vmem [resolvable:$true] %s16
      %22 = dma.hbm_to_vmem [thread:$0]  %s0, 256, %s17, [#allocation3], 128, 128, 8
    $region5: #{tpu_custom_call.1} parent=1 // pred_fallthru
      _
    // Predicated region
    $region6: #{tpu_custom_call.1} parent=1 // pred_check
      _
    $region7: #{tpu_custom_call.1} parent=1 // pred_check_branch
      %24 = sbr.rel (0) target = $region9
    $region8: #{tpu_custom_call.1} parent=1 // pred_region
      %s26 = ssub.s32 2048, 2048
      %27 = vsyncadd [#allocation6], %s26
      %s28 = sshll.u32 [#allocation5], 4
      %s29 = int_to_ptr.vmem [resolvable:$true] %s28
      %34 = dma.hbm_to_vmem [thread:$0]  %s1, 2048, %s29, [#allocation6], 128, 128, 8
    $region9: #{tpu_custom_call.1} parent=1 // pred_fallthru
      _
    // Predicated region
    $region10: #{tpu_custom_call.1} parent=1 // pred_check
      _
    $region11: #{tpu_custom_call.1} parent=1 // pred_check_branch
      %36 = sbr.rel (0) target = $region13
    $region12: #{tpu_custom_call.1} parent=1 // pred_region
      %s38 = ssub.s32 16, 16
      %39 = vsyncadd [#allocation6], %s38
      %s41 = sshll.u32 [#allocation7], 4
      %s42 = int_to_ptr.vmem [resolvable:$true] %s41
      %44 = dma.hbm_to_vmem [thread:$0]  %s2, 16, %s42, [#allocation6]
    $region13: #{tpu_custom_call.1} parent=1 // pred_fallthru
      _
    // Predicated region
    $region14: #{tpu_custom_call.1} parent=1 // pred_check
      _
    $region15: #{tpu_custom_call.1} parent=1 // pred_check_branch
      %46 = sbr.rel (0) target = $region17
    $region16: #{tpu_custom_call.1} parent=1 // pred_region
      %47 = dma.done [#allocation3], 256
    $region17: #{tpu_custom_call.1} parent=1 // pred_fallthru
      _
    // Predicated region
    $region18: #{tpu_custom_call.1} parent=1 // pred_check
      _
    $region19: #{tpu_custom_call.1} parent=1 // pred_check_branch
      %49 = sbr.rel (0) target = $region21
    $region20: #{tpu_custom_call.1} parent=1 // pred_region
      %50 = dma.done [#allocation6], 2048
    $region21: #{tpu_custom_call.1} parent=1 // pred_fallthru
      _
    // Predicated region
    $region22: #{tpu_custom_call.1} parent=1 // pred_check
      _
    $region23: #{tpu_custom_call.1} parent=1 // pred_check_branch
      %52 = sbr.rel (0) target = $region25
    $region24: #{tpu_custom_call.1} parent=1 // pred_region
      %53 = dma.done [#allocation6], 16
    $region25: #{tpu_custom_call.1} parent=1 // pred_fallthru
      _
    %v54 = vld [vmem:[#allocation2] sm:$0xff]
    %v55 = vld [vmem:[#allocation2 + $0x8] sm:$0xff]
    %v56 = vmul.f32 %v54, %v54
    %v57 = vmul.f32 %v55, %v55
    %58 = vadd.xlane.f32.xlu0 %v56
    %v59 = vpop.xlane.xlu0 %58
    %60 = vadd.xlane.f32.xlu0 %v57
    %v61 = vpop.xlane.xlu0 %60
    %v62 = vld [vmem:[#allocation5] sm:$0xff]
    %v63 = vld [vmem:[#allocation5 + $0x8] sm:$0xff]
    %v64 = vld [vmem:[#allocation5 + $0x10] sm:$0xff]
    %v65 = vld [vmem:[#allocation5 + $0x18] sm:$0xff]
    %v66 = vld [vmem:[#allocation5 + $0x20] sm:$0xff]
    %v67 = vld [vmem:[#allocation5 + $0x28] sm:$0xff]
    %v68 = vld [vmem:[#allocation5 + $0x30] sm:$0xff]
    %v69 = vld [vmem:[#allocation5 + $0x38] sm:$0xff]
    %v70 = vld [vmem:[#allocation5 + $0x40] sm:$0xff]
    %v71 = vld [vmem:[#allocation5 + $0x48] sm:$0xff]
    %v72 = vld [vmem:[#allocation5 + $0x50] sm:$0xff]
    %v73 = vld [vmem:[#allocation5 + $0x58] sm:$0xff]
    %v74 = vld [vmem:[#allocation5 + $0x60] sm:$0xff]
    %v75 = vld [vmem:[#allocation5 + $0x68] sm:$0xff]
    %v76 = vld [vmem:[#allocation5 + $0x70] sm:$0xff]
    %v77 = vld [vmem:[#allocation5 + $0x78] sm:$0xff]
    %78 = vmatprep.subr.mxu0 0.0
    %79 = vmatpush1.xpose.msra.mxu0 %v62
    %80 = vmatprep.subr.mxu0 0.0
    %81 = vmatpush1.xpose.msra.mxu0 %v63
    %82 = vmatprep.subr.mxu0 0.0
    %83 = vmatpush1.xpose.msra.mxu0 %v64
    %84 = vmatprep.subr.mxu0 0.0
    %85 = vmatpush1.xpose.msra.mxu0 %v65
    %86 = vmatprep.subr.mxu0 0.0
    %87 = vmatpush1.xpose.msra.mxu0 %v66
    %88 = vmatprep.subr.mxu0 0.0
    %89 = vmatpush1.xpose.msra.mxu0 %v67
    %90 = vmatprep.subr.mxu0 0.0
    %91 = vmatpush1.xpose.msra.mxu0 %v68
    %92 = vmatprep.subr.mxu0 0.0
    %93 = vmatpush1.xpose.msra.mxu0 %v69
    %94 = vmatprep.subr.mxu0 0.0
    %95 = vmatpush1.xpose.msra.mxu0 %v70
    %96 = vmatprep.subr.mxu0 0.0
    %97 = vmatpush1.xpose.msra.mxu0 %v71
    %98 = vmatprep.subr.mxu0 0.0
    %99 = vmatpush1.xpose.msra.mxu0 %v72
    %100 = vmatprep.subr.mxu0 0.0
    %101 = vmatpush1.xpose.msra.mxu0 %v73
    %102 = vmatprep.subr.mxu0 0.0
    %103 = vmatpush1.xpose.msra.mxu0 %v74
    %104 = vmatprep.subr.mxu0 0.0
    %105 = vmatpush1.xpose.msra.mxu0 %v75
    %106 = vmatprep.subr.mxu0 0.0
    %107 = vmatpush1.xpose.msra.mxu0 %v76
    %108 = vmatprep.subr.mxu0 0.0
    %109 = vmatpush1.xpose.msra.mxu0 %v77
    %110 = vmatprep.subr.mxu0 0.0
    %111 = vmatpush1.xpose.msra.mxu0 0.0
    %112 = vmatprep.subr.mxu0 0.0
    %113 = vmatpush1.xpose.msra.mxu0 0.0
    %114 = vmatprep.subr.mxu0 0.0
    %115 = vmatpush1.xpose.msra.mxu0 0.0
    %116 = vmatprep.subr.mxu0 0.0
    %117 = vmatpush1.xpose.msra.mxu0 0.0
    %118 = vmatprep.subr.mxu0 0.0
    %119 = vmatpush1.xpose.msra.mxu0 0.0
    %120 = vmatprep.subr.mxu0 0.0
    %121 = vmatpush1.xpose.msra.mxu0 0.0
    %122 = vmatprep.subr.mxu0 0.0
    %123 = vmatpush1.xpose.msra.mxu0 0.0
    %124 = vmatprep.subr.mxu0 0.0
    %125 = vmatpush1.xpose.msra.mxu0 0.0
    %126 = vmatprep.subr.mxu0 0.0
    %127 = vmatpush1.xpose.msra.mxu0 0.0
    %128 = vmatprep.subr.mxu0 0.0
    %129 = vmatpush1.xpose.msra.mxu0 0.0
    %130 = vmatprep.subr.mxu0 0.0
    %131 = vmatpush1.xpose.msra.mxu0 0.0
    %132 = vmatprep.subr.mxu0 0.0
    %133 = vmatpush1.xpose.msra.mxu0 0.0
    %134 = vmatprep.subr.mxu0 0.0
    %135 = vmatpush1.xpose.msra.mxu0 0.0
    %136 = vmatprep.subr.mxu0 0.0
    %137 = vmatpush1.xpose.msra.mxu0 0.0
    %138 = vmatprep.subr.mxu0 0.0
    %139 = vmatpush1.xpose.msra.mxu0 0.0
    %140 = vmatprep.subr.mxu0 0.0
    %141 = vmatpush1.xpose.msra.mxu0 0.0
    %142 = vmatprep.mubr.f32.mxu0 0.0
    %143 = vmatmul.mubr.f32.gmra.mrb[0].mxu0 %v54
    %v144 = vpop.f32.mrb[0].mxu0
    %v145 = vadd.f32 0.0, %v144
    %v146 = vpop.f32.mrb[0].mxu0
    %147 = vmatprep.mubr.f32.mxu0 0.0
    %148 = vmatmul.mubr.f32.gmra.mrb[0].mxu0 %v55
    %v149 = vpop.f32.mrb[0].mxu0
    %v150 = vadd.f32 0.0, %v149
    %v151 = vpop.f32.mrb[0].mxu0
    %152 = vdwg.mxu0
    %v153 = vrsqrt.pop %v59
    %v154 = vmul.f32 %v59, %v153
    %vm155 = vcmp.eq.f32.partialorder %v59, inf
    %v156 = vsel %vm155, %v59, %v154
    %vm157 = vcmp.eq.f32.partialorder %v59, 0.0
    %v158 = vand.u32 %v59, 2147483648
    %v159 = vsel %vm157, %v158, %v156
    %v160 = vrsqrt.pop %v61
    %v161 = vmul.f32 %v61, %v160
    %vm162 = vcmp.eq.f32.partialorder %v61, inf
    %v163 = vsel %vm162, %v61, %v161
    %vm164 = vcmp.eq.f32.partialorder %v61, 0.0
    %v165 = vand.u32 %v61, 2147483648
    %v166 = vsel %vm164, %v165, %v163
    %v167 = vadd.f32 %v159, 1e-05
    %v168 = vadd.f32 %v166, 1e-05
    %v169 = vrcp.pop %v167
    %v170 = vmul.f32 1.0, %v169
    %v171 = vrcp.pop %v168
    %v172 = vmul.f32 1.0, %v171
    %v173 = vld [vmem:[#allocation7] sm:$0x1]
    %v174 = vmul.f32 %v145, 2.0
    %v175 = vmul.f32 %v150, 2.0
    %v176 = vmul.f32 %v174, %v170
    %v177 = vmul.f32 %v175, %v172
    %v179 = vlaneseq
    %v180 = vshrl.u32 %v179, 7
    %v181 = vsub.s32 0, %v180
    %v182 = vrot.slane %v173, %v181
    %v184 = vmul.f32 %v176, %v182
    %v185 = vmul.f32 %v177, %v182
    %186 = vst [vmem:[#allocation8] sm:$0xff] %v184
    %187 = vst [vmem:[#allocation8 + $0x8] sm:$0xff] %v185
    // Predicated region
    $region26: #{tpu_custom_call.1} parent=1 // pred_check
      _
    $region27: #{tpu_custom_call.1} parent=1 // pred_check_branch
      %189 = sbr.rel (0) target = $region29
    $region28: #{tpu_custom_call.1} parent=1 // pred_region
      %s191 = ssub.s32 256, 256
      %192 = vsyncadd [#allocation4], %s191
      %s193 = sshll.u32 [#allocation8], 4
      %s194 = int_to_ptr.vmem [resolvable:$true] %s193
      %199 = dma.vmem_to_hbm [thread:$0]  %s194, 256, %s3, [#allocation4], 128, 128, 8
    $region29: #{tpu_custom_call.1} parent=1 // pred_fallthru
      _
    // Predicated region
    $region30: #{tpu_custom_call.1} parent=1 // pred_check
      _
    $region31: #{tpu_custom_call.1} parent=1 // pred_check_branch
      %201 = sbr.rel (0) target = $region33
    $region32: #{tpu_custom_call.1} parent=1 // pred_region
      %202 = dma.done [#allocation4], 256
    $region33: #{tpu_custom_call.1} parent=1 // pred_fallthru
      _
    %203 = vsyncpa [#allocation3], 1
    %204 = vsyncpa [#allocation6], 1
    %205 = vsyncpa [#allocation4], 1

</llo_original>
